<compile_context>
chip_gen: v5e
topology: v5e:2x2
jax: 0.10.0
libtpu: 0.0.40
codegen_flags: <defaults>
</compile_context>

<pallas_src>
import functools

import jax
import jax.numpy as jnp
from jax import lax
from jax.experimental import pallas as pl
from jax.experimental.pallas import tpu as pltpu

EPS = 0.01

# Pipelined-buffer VMEM budget and scoped VMEM limit.  Chosen to be safe on all
# generations (v7x has only 64 MiB physical VMEM) while giving ~4-8 MiB input
# blocks, which amortizes the ~0.35 us per-grid-step overhead to a few percent.
_PIPELINE_VMEM_BUDGET = 28 * 1024 * 1024
_VMEM_LIMIT_BYTES = 48 * 1024 * 1024


def _round_up(x: int, m: int) -> int:
    return ((x + m - 1) // m) * m


def _cdiv(a: int, b: int) -> int:
    return (a + b - 1) // b


def _nse_kernel(yp_ref, yt_ref, qs_ref, out_ref, acc_ref, *, tile_b, n_tiles, batch):
    c = pl.program_id(0)  # parallel (core) axis
    j = pl.program_id(1)  # arbitrary (reduction) axis

    @pl.when(j == 0)
    def _():
        acc_ref[...] = jnp.zeros_like(acc_ref)

    # Elementwise squared error (pure VPU work, hidden under the HBM stream).
    diff = yp_ref[...].astype(jnp.float32) - yt_ref[...].astype(jnp.float32)
    sq_err = diff * diff                                        # (tile_b, T)

    # Per-sample weights from the per-tile q_stds block; exact reciprocal
    # (approx=False) to preserve accuracy -- the divide is not on the critical
    # path of a memory-bound kernel.
    qs = qs_ref[...].astype(jnp.float32)                        # (tile_b, 1)
    r = pl.reciprocal(qs + EPS)
    w = r * r                                                   # (tile_b, 1)

    # Mask rows past the real batch size (ragged tail and the at-most-one
    # excess grid step on the split axis).  jnp.where selects, so garbage
    # (inf/nan) from out-of-bounds DMA tails never propagates.
    linear = c * n_tiles + j
    row0 = linear * tile_b
    row_ids = row0 + lax.broadcasted_iota(jnp.int32, (tile_b, 1), 0)
    valid = row_ids < batch                                     # (tile_b, 1)
    contrib = jnp.where(valid, w * sq_err, 0.0)                 # (tile_b, T)

    # Sublane reduction into a single-vreg-row accumulator (VPU/XLU work that is
    # free filler under HBM stalls); avoids a block-sized read-modify-write.
    acc_ref[...] += jnp.sum(contrib, axis=0, keepdims=True)     # (1, T)

    @pl.when(j == pl.num_programs(1) - 1)
    def _():
        total = jnp.sum(acc_ref[...])
        # Lane-dense (8, 128) one-hot store: partial sum lives at [0, 0].
        onehot = (lax.broadcasted_iota(jnp.int32, (8, 128), 0) == 0) & (
            lax.broadcasted_iota(jnp.int32, (8, 128), 1) == 0
        )
        out_ref[...] = jnp.where(onehot, total, jnp.float32(0.0))


def nse_loss(y_pred, y_true, q_stds):
    """Batch-wise NSE loss. y_pred, y_true: (B, T); q_stds: (B, 1)."""
    B, T = y_pred.shape
    assert y_true.shape == (B, T)
    assert q_stds.shape == (B, 1)
    assert B >= 1 and T >= 1

    in_bytes = jnp.dtype(y_pred.dtype).itemsize

    # Pipelined VMEM per batch row: 2 inputs x 2 buffers x T, plus the
    # lane-padded (tile_b, 1) q_stds block (each 8-row group costs a full
    # 4 KiB (8,128) tile per buffer -> 512 B/row/buffer, double buffered).
    per_row_bytes = 2 * 2 * T * in_bytes + 2 * 512
    rows_cap = max(8, (_PIPELINE_VMEM_BUDGET // per_row_bytes) // 8 * 8)

    # Balanced tiling: number of real tiles first, then 8-aligned tile height.
    # Guarantees (n_real-1)*tile_b < B, i.e. every real tile starts in-bounds,
    # and per-tile padding is < 8 rows.
    n_real = _cdiv(B, rows_cap)
    tile_b = _round_up(_cdiv(B, n_real), 8)

    # Split the tile loop across the two TensorCores only where they exist.
    try:
        kind = jax.devices()[0].device_kind.lower()
    except Exception:  # pragma: no cover - defensive; fall back to 1 split.
        kind = ""
    is_v7 = "7" in kind
    num_splits = 2 if (is_v7 and n_real >= 2) else 1
    n_tiles = _cdiv(n_real, num_splits)

    kernel = functools.partial(
        _nse_kernel, tile_b=tile_b, n_tiles=n_tiles, batch=B
    )

    def row_map(c, j):
        # Clamp so the (at most one) excess grid step on the split axis re-reads
        # an in-bounds tile; its rows are fully masked out inside the kernel.
        return (jnp.minimum(c * n_tiles + j, n_real - 1), 0)

    cost = pl.CostEstimate(
        flops=5 * B * T + 4 * B,
        transcendentals=B,
        bytes_accessed=2 * B * T * in_bytes + B * 4 + num_splits * 8 * 128 * 4,
    )

    # TODO(synk): if T is so large that even an 8-row block overflows VMEM,
    # an additional time-axis tiling would be needed; typical discharge series
    # lengths are far below that.
    partials = pl.pallas_call(
        kernel,
        out_shape=jax.ShapeDtypeStruct((num_splits * 8, 128), jnp.float32),
        grid_spec=pltpu.PrefetchScalarGridSpec(
            num_scalar_prefetch=0,
            grid=(num_splits, n_tiles),
            in_specs=[
                pl.BlockSpec((tile_b, T), row_map),
                pl.BlockSpec((tile_b, T), row_map),
                pl.BlockSpec((tile_b, 1), row_map),
            ],
            out_specs=pl.BlockSpec((8, 128), lambda c, j: (c, 0)),
            scratch_shapes=[pltpu.VMEM((1, T), jnp.float32)],
        ),
        compiler_params=pltpu.CompilerParams(
            dimension_semantics=("parallel", "arbitrary"),
            vmem_limit_bytes=_VMEM_LIMIT_BYTES,
        ),
        cost_estimate=cost,
    )(y_pred, y_true, q_stds)

    return jnp.sum(partials) / jnp.float32(B * T)


def nse_loss_ref(y_pred, y_true, q_stds):
    sq = (y_pred - y_true) ** 2
    w = 1.0 / (q_stds + EPS) ** 2
    return jnp.mean(w * sq)


if __name__ == "__main__":
    key = jax.random.PRNGKey(0)
    k1, k2, k3 = jax.random.split(key, 3)

    # Small shapes consistent with the module (batch of discharge time series).
    B, T = 16, 128
    y_pred = jax.random.normal(k1, (B, T), dtype=jnp.float32)
    y_true = jax.random.normal(k2, (B, T), dtype=jnp.float32)
    q_stds = jax.random.uniform(k3, (B, 1), dtype=jnp.float32, minval=0.1, maxval=2.0)

    loss = jax.block_until_ready(nse_loss(y_pred, y_true, q_stds))
    ref = jax.block_until_ready(nse_loss_ref(y_pred, y_true, q_stds))
    assert jnp.allclose(loss, ref, rtol=1e-5, atol=1e-6), (loss, ref)

    # Ragged batch / non-128 sequence length exercises the in-kernel masking
    # path (no wrapper-side padding of the big inputs).
    B2, T2 = 13, 96
    yp2 = jax.random.normal(k1, (B2, T2), dtype=jnp.float32)
    yt2 = jax.random.normal(k2, (B2, T2), dtype=jnp.float32)
    qs2 = jax.random.uniform(k3, (B2, 1), dtype=jnp.float32, minval=0.1, maxval=2.0)
    loss2 = jax.block_until_ready(nse_loss(yp2, yt2, qs2))
    ref2 = jax.block_until_ready(nse_loss_ref(yp2, yt2, qs2))
    assert jnp.allclose(loss2, ref2, rtol=1e-5, atol=1e-6), (loss2, ref2)

    print("KERNEL_OK")
</pallas_src>

<mosaic_0001>
module attributes {stable_mosaic.version = 11 : i64} {
  func.func @_nse_kernel(%arg0: i32, %arg1: i32, %arg2: memref<16x128xf32, #tpu.memory_space<vmem>>, %arg3: memref<16x128xf32, #tpu.memory_space<vmem>>, %arg4: memref<16x1xf32, #tpu.memory_space<vmem>>, %arg5: memref<8x128xf32, #tpu.memory_space<vmem>>, %arg6: memref<1x128xf32, #tpu.memory_space<vmem>>) attributes {dimension_semantics = [#tpu.dimension_semantics<parallel>, #tpu.dimension_semantics<arbitrary>], iteration_bounds = array<i64: 1, 1>, scalar_prefetch = 0 : i64, scratch_operands = 1 : i64, tpu.core_type = #tpu.core_type<tc>, window_params = [{transform_indices = @transform_0, window_bounds = array<i64: 16, 128>}, {transform_indices = @transform_1, window_bounds = array<i64: 16, 128>}, {transform_indices = @transform_2, window_bounds = array<i64: 16, 1>}, {transform_indices = @transform_3, window_bounds = array<i64: 8, 128>}]} {
    %c0_i32 = arith.constant 0 : i32
    %0 = arith.cmpi eq, %arg1, %c0_i32 : i32
    %1 = arith.extui %0 : i1 to i32
    %c0_i32_0 = arith.constant 0 : i32
    %2 = arith.cmpi ne, %1, %c0_i32_0 : i32
    scf.if %2 {
      %cst_15 = arith.constant 0.000000e+00 : f32
      %34 = vector.broadcast %cst_15 : f32 to vector<1x128xf32>
      %c0_16 = arith.constant 0 : index
      %c0_17 = arith.constant 0 : index
      %35 = vector.load %arg6[%c0_16, %c0_17] : memref<1x128xf32, #tpu.memory_space<vmem>>, vector<1x128xf32>
      tpu.vector_store %arg6[%c0_16, %c0_17], %34 {strides = array<i32>} : memref<1x128xf32, #tpu.memory_space<vmem>>, vector<1x128xf32>,
    } else {
    }
    %c0 = arith.constant 0 : index
    %c0_1 = arith.constant 0 : index
    %3 = vector.load %arg2[%c0, %c0_1] : memref<16x128xf32, #tpu.memory_space<vmem>>, vector<16x128xf32>
    %c0_2 = arith.constant 0 : index
    %c0_3 = arith.constant 0 : index
    %4 = vector.load %arg3[%c0_2, %c0_3] : memref<16x128xf32, #tpu.memory_space<vmem>>, vector<16x128xf32>
    %5 = arith.subf %3, %4 : vector<16x128xf32>
    %6 = arith.mulf %5, %5 : vector<16x128xf32>
    %c0_4 = arith.constant 0 : index
    %c0_5 = arith.constant 0 : index
    %7 = vector.load %arg4[%c0_4, %c0_5] : memref<16x1xf32, #tpu.memory_space<vmem>>, vector<16x1xf32>
    %cst = arith.constant 0.00999999977 : f32
    %8 = vector.broadcast %cst : f32 to vector<16x1xf32>
    %9 = arith.addf %7, %8 : vector<16x1xf32>
    %10 = tpu.reciprocal %9 : vector<16x1xf32> -> vector<16x1xf32>
    %11 = arith.mulf %10, %10 : vector<16x1xf32>
    %c1_i32 = arith.constant 1 : i32
    %12 = arith.muli %arg0, %c1_i32 : i32
    %13 = arith.addi %12, %arg1 : i32
    %c16_i32 = arith.constant 16 : i32
    %14 = arith.muli %13, %c16_i32 : i32
    %15 = tpu.iota {dimensions = array<i32: 0>} : vector<16x1xi32>
    %16 = vector.broadcast %14 : i32 to vector<16x1xi32>
    %17 = arith.addi %16, %15 : vector<16x1xi32>
    %c16_i32_6 = arith.constant 16 : i32
    %18 = vector.broadcast %c16_i32_6 : i32 to vector<16x1xi32>
    %19 = arith.cmpi slt, %17, %18 : vector<16x1xi32>
    %20 = vector.broadcast %11 : vector<16x1xf32> to vector<16x128xf32>
    %21 = arith.mulf %20, %6 : vector<16x128xf32>
    %cst_7 = arith.constant 0.000000e+00 : f32
    %22 = vector.shape_cast %19 : vector<16x1xi1> to vector<16x1xi1>
    %23 = vector.broadcast %22 : vector<16x1xi1> to vector<16x128xi1>
    %24 = vector.broadcast %cst_7 : f32 to vector<16x128xf32>
    %25 = arith.select %23, %21, %24 : vector<16x128xi1>, vector<16x128xf32>
    %c0_8 = arith.constant 0 : index
    %c0_9 = arith.constant 0 : index
    %26 = vector.load %arg6[%c0_8, %c0_9] : memref<1x128xf32, #tpu.memory_space<vmem>>, vector<1x128xf32>
    %cst_10 = arith.constant dense<0.000000e+00> : vector<128xf32>
    %27 = vector.multi_reduction <add>, %25, %cst_10 [0] : vector<16x128xf32> to vector<128xf32>
    %28 = vector.shape_cast %27 : vector<128xf32> to vector<1x128xf32>
    %29 = arith.addf %26, %28 : vector<1x128xf32>
    %c0_11 = arith.constant 0 : index
    %c0_12 = arith.constant 0 : index
    %30 = vector.load %arg6[%c0_11, %c0_12] : memref<1x128xf32, #tpu.memory_space<vmem>>, vector<1x128xf32>
    tpu.vector_store %arg6[%c0_11, %c0_12], %29 {strides = array<i32>} : memref<1x128xf32, #tpu.memory_space<vmem>>, vector<1x128xf32>,
    %c0_i32_13 = arith.constant 0 : i32
    %31 = arith.cmpi eq, %arg1, %c0_i32_13 : i32
    %32 = arith.extui %31 : i1 to i32
    %c0_i32_14 = arith.constant 0 : i32
    %33 = arith.cmpi ne, %32, %c0_i32_14 : i32
    scf.if %33 {
      %c0_15 = arith.constant 0 : index
      %c0_16 = arith.constant 0 : index
      %34 = vector.load %arg6[%c0_15, %c0_16] : memref<1x128xf32, #tpu.memory_space<vmem>>, vector<1x128xf32>
      %35 = vector.shape_cast %34 : vector<1x128xf32> to vector<1x1x128xf32>
      %cst_17 = arith.constant dense<0.000000e+00> : vector<1xf32>
      %36 = vector.multi_reduction <add>, %35, %cst_17 [1, 2] : vector<1x1x128xf32> to vector<1xf32>
      %37 = vector.shape_cast %36 : vector<1xf32> to vector<1x1x1xf32>
      %38 = vector.extract %37[0, 0, 0] : f32 from vector<1x1x1xf32>
      %39 = tpu.iota {dimensions = array<i32: 0>} : vector<8x128xi32>
      %c0_i32_18 = arith.constant 0 : i32
      %40 = vector.broadcast %c0_i32_18 : i32 to vector<8x128xi32>
      %41 = arith.cmpi eq, %39, %40 : vector<8x128xi32>
      %42 = tpu.iota {dimensions = array<i32: 1>} : vector<8x128xi32>
      %c0_i32_19 = arith.constant 0 : i32
      %43 = vector.broadcast %c0_i32_19 : i32 to vector<8x128xi32>
      %44 = arith.cmpi eq, %42, %43 : vector<8x128xi32>
      %45 = arith.andi %41, %44 : vector<8x128xi1>
      %cst_20 = arith.constant 0.000000e+00 : f32
      %46 = vector.broadcast %38 : f32 to vector<8x128xf32>
      %47 = vector.broadcast %cst_20 : f32 to vector<8x128xf32>
      %48 = arith.select %45, %46, %47 : vector<8x128xi1>, vector<8x128xf32>
      %c0_21 = arith.constant 0 : index
      %c0_22 = arith.constant 0 : index
      %49 = vector.load %arg5[%c0_21, %c0_22] : memref<8x128xf32, #tpu.memory_space<vmem>>, vector<8x128xf32>
      tpu.vector_store %arg5[%c0_21, %c0_22], %48 {strides = array<i32>} : memref<8x128xf32, #tpu.memory_space<vmem>>, vector<8x128xf32>,
    } else {
    }
    return
  }
  func.func @transform_0(%arg0: i32, %arg1: i32) -> (i32, i32) {
    %c1_i32 = arith.constant 1 : i32
    %0 = arith.muli %arg0, %c1_i32 : i32
    %1 = arith.addi %0, %arg1 : i32
    %c0_i32 = arith.constant 0 : i32
    %2 = arith.minsi %1, %c0_i32 : i32
    %c0_i32_0 = arith.constant 0 : i32
    %c0_i32_1 = arith.constant 0 : i32
    return %2, %c0_i32_0 : i32, i32
  }
  func.func @transform_1(%arg0: i32, %arg1: i32) -> (i32, i32) {
    %c1_i32 = arith.constant 1 : i32
    %0 = arith.muli %arg0, %c1_i32 : i32
    %1 = arith.addi %0, %arg1 : i32
    %c0_i32 = arith.constant 0 : i32
    %2 = arith.minsi %1, %c0_i32 : i32
    %c0_i32_0 = arith.constant 0 : i32
    %c0_i32_1 = arith.constant 0 : i32
    return %2, %c0_i32_0 : i32, i32
  }
  func.func @transform_2(%arg0: i32, %arg1: i32) -> (i32, i32) {
    %c1_i32 = arith.constant 1 : i32
    %0 = arith.muli %arg0, %c1_i32 : i32
    %1 = arith.addi %0, %arg1 : i32
    %c0_i32 = arith.constant 0 : i32
    %2 = arith.minsi %1, %c0_i32 : i32
    %c0_i32_0 = arith.constant 0 : i32
    %c0_i32_1 = arith.constant 0 : i32
    return %2, %c0_i32_0 : i32, i32
  }
  func.func @transform_3(%arg0: i32, %arg1: i32) -> (i32, i32) {
    %c0_i32 = arith.constant 0 : i32
    %c0_i32_0 = arith.constant 0 : i32
    return %arg0, %c0_i32 : i32, i32
  }
}

</mosaic_0001>

<llo_original>
// kernel: tpu_custom_call.1
$region0: #{tpu_custom_call.1}
  #allocation0 [shape = 'u32[]', space=smem, size = 0x4, offset = 0x4, fixed_abs, tag = 'smem constant byte address 0x4 - core index']
  #allocation1 [shape = 'u32[72,128]{1,0:T(1,128)}', space=vmem, size = 0x9000, scoped, tag = 'internal scratch']
  #allocation2 [shape = 'f32[1,128]{1,0:T(1,128)}', space=vmem, size = 0x200, scoped, tag = 'scratch operand']
  %s0 = inlined_call_operand.vmem [shape: f32[16,128], index: 0, kind: input, shape index: {}]
  %s1 = inlined_call_operand.hbm [shape: f32[16,128], index: 1, kind: input, shape index: {}]
  %s2 = inlined_call_operand.vmem [shape: f32[16,1], index: 2, kind: input, shape index: {}]
  %s3 = inlined_call_operand.hbm [shape: f32[8,128], index: 3, kind: output, shape index: {}]
  %s4 = sld [smem:[#allocation0]]
  $region34: #{tpu_custom_call.1} parent=0
    _
  %s6 = ssub.s32 1, %s4
  %s7 = scalar_select 0, %s6, %s4
  $region1: #{tpu_custom_call.1} parent=0
    #allocation3 [shape = 'u8[8192]{0}', space=vmem, size = 0x2000, scoped, tag = 'input window, operand 1, single buffered']
    #allocation4 [shape = 's32[1]{0}', space=sflag, size = 0x4, scoped, tag = 'scoped memory for tpu_custom_call.1']
    #allocation5 [shape = 's32[1]{0}', space=sflag, size = 0x4, scoped, tag = 'scoped memory for tpu_custom_call.1']
    #allocation6 [shape = 'u8[4096]{0}', space=vmem, size = 0x1000, scoped, tag = 'output window, operand 0, single buffered']
    %8 = vsyncpa [#allocation4], 0
    %9 = vsyncpa [#allocation5], 0
    // Predicated region
    $region2: #{tpu_custom_call.1} parent=1 // pred_check
      _
    $region3: #{tpu_custom_call.1} parent=1 // pred_check_branch
      %11 = sbr.rel (0) target = $region5
    $region4: #{tpu_custom_call.1} parent=1 // pred_region
      %s12 = sadd.s32 0, 0
      %p13 = scmp.lt.s32.totalorder %s12, 0
      %s14 = scalar_select %p13, %s12, 0
      %s15 = smul.u32 2, %s14
      %p16 = scmp.lt.s32.totalorder %s15, 1
      %s17 = scalar_select %p16, %s15, 1
      %s18 = smul.addr %s17, 8
      %s19 = scalar_lea.vmem %s0, %s18
      %s20 = sadd.s32 0, 0
      %p21 = scmp.lt.s32.totalorder %s20, 0
      %s22 = scalar_select %p21, %s20, 0
      %s23 = smul.u32 2, %s22
    $region5: #{tpu_custom_call.1} parent=1 // pred_fallthru
      _
    // Predicated region
    $region6: #{tpu_custom_call.1} parent=1 // pred_check
      _
    $region7: #{tpu_custom_call.1} parent=1 // pred_check_branch
      %25 = sbr.rel (0) target = $region9
    $region8: #{tpu_custom_call.1} parent=1 // pred_region
      %s26 = sadd.s32 0, 0
      %p27 = scmp.lt.s32.totalorder %s26, 0
      %s28 = scalar_select %p27, %s26, 0
      %s29 = smul.u32 2, %s28
      %31 = vsyncadd [#allocation4], 0
      %s32 = smul.addr %s29, 8
      %s33 = scalar_lea.hbm %s1, %s32
      %s34 = sshll.u32 %s33, 4
      %s35 = int_to_ptr.hbm [resolvable:$true] %s34
      %s36 = sshll.u32 [#allocation3], 4
      %s37 = int_to_ptr.vmem [resolvable:$true] %s36
      %42 = dma.hbm_to_vmem [thread:$0]  %s35, 256, %s37, [#allocation4], 128, 128, 8
    $region9: #{tpu_custom_call.1} parent=1 // pred_fallthru
      _
    // Predicated region
    $region10: #{tpu_custom_call.1} parent=1 // pred_check
      _
    $region11: #{tpu_custom_call.1} parent=1 // pred_check_branch
      %44 = sbr.rel (0) target = $region13
    $region12: #{tpu_custom_call.1} parent=1 // pred_region
      %s45 = sadd.s32 0, 0
      %p46 = scmp.lt.s32.totalorder %s45, 0
      %s47 = scalar_select %p46, %s45, 0
      %s48 = smul.u32 2, %s47
      %p49 = scmp.lt.s32.totalorder %s48, 1
      %s50 = scalar_select %p49, %s48, 1
      %s51 = smul.addr %s50, 8
      %s52 = scalar_lea.vmem %s2, %s51
      %s53 = sadd.s32 0, 0
      %p54 = scmp.lt.s32.totalorder %s53, 0
      %s55 = scalar_select %p54, %s53, 0
      %s56 = smul.u32 2, %s55
    $region13: #{tpu_custom_call.1} parent=1 // pred_fallthru
      _
    // Predicated region
    $region14: #{tpu_custom_call.1} parent=1 // pred_check
      _
    $region15: #{tpu_custom_call.1} parent=1 // pred_check_branch
      %58 = sbr.rel (0) target = $region17
    $region16: #{tpu_custom_call.1} parent=1 // pred_region
      %60 = dma.done [#allocation4], 256
    $region17: #{tpu_custom_call.1} parent=1 // pred_fallthru
      _
    %s61 = sadd.s32 0, 0
    %p62 = scmp.lt.s32.totalorder %s61, 0
    %s63 = scalar_select %p62, %s61, 0
    %s64 = smul.u32 2, %s63
    %p65 = scmp.lt.s32.totalorder %s64, 1
    %s66 = scalar_select %p65, %s64, 1
    %s67 = smul.addr %s66, 8
    %s68 = scalar_lea.vmem %s0, %s67
    %s69 = sadd.s32 0, 0
    %p70 = scmp.lt.s32.totalorder %s69, 0
    %s71 = scalar_select %p70, %s69, 0
    %s72 = smul.u32 2, %s71
    %p73 = scmp.lt.s32.totalorder %s72, 1
    %s74 = scalar_select %p73, %s72, 1
    %s75 = smul.addr %s74, 8
    %s76 = scalar_lea.vmem %s2, %s75
    %s77 = sadd.s32 0, 0
    %p78 = scmp.lt.s32.totalorder %s77, 0
    %s79 = scalar_select %p78, %s77, 0
    %s80 = smul.u32 2, %s79
    %p81 = scmp.lt.s32.totalorder %s80, 1
    %s82 = scalar_select %p81, %s80, 1
    %s83 = smul.addr %s82, 8
    %s84 = scalar_lea.vmem %s0, %s83
    %s85 = sadd.s32 0, 0
    %p86 = scmp.lt.s32.totalorder %s85, 0
    %s87 = scalar_select %p86, %s85, 0
    %s88 = smul.u32 2, %s87
    %s89 = sadd.s32 0, 0
    %p90 = scmp.lt.s32.totalorder %s89, 0
    %s91 = scalar_select %p90, %s89, 0
    %s92 = smul.u32 2, %s91
    %s93 = sadd.s32 0, 0
    %p94 = scmp.lt.s32.totalorder %s93, 0
    %s95 = scalar_select %p94, %s93, 0
    %s96 = smul.u32 2, %s95
    %p97 = scmp.lt.s32.totalorder %s96, 1
    %s98 = scalar_select %p97, %s96, 1
    %s99 = smul.addr %s98, 8
    %s100 = scalar_lea.vmem %s2, %s99
    %s101 = sadd.s32 0, 0
    %p102 = scmp.lt.s32.totalorder %s101, 0
    %s103 = scalar_select %p102, %s101, 0
    %s104 = smul.u32 2, %s103
    %p105 = scmp.eq.s32.totalorder 0, 0
    // Predicated region
    $region18: #{tpu_custom_call.1} parent=1 // pred_check
      %p106 = pneg %p105
    $region19: #{tpu_custom_call.1} parent=1 // pred_check_branch
      %108 = sbr.rel (%p106) target = $region21
    $region20: #{tpu_custom_call.1} parent=1 // pred_region
      %109 = vst [vmem:[#allocation2] sm:$0x1] 0.0
    $region21: #{tpu_custom_call.1} parent=1 // pred_fallthru
      _
    %v110 = vld [vmem:[%s84] sm:$0xff]
    %v111 = vld [vmem:[%s84 + $0x8] sm:$0xff]
    %v112 = vld [vmem:[#allocation3] sm:$0xff]
    %v113 = vld [vmem:[#allocation3 + $0x8] sm:$0xff]
    %v114 = vsub.f32 %v110, %v112
    %v115 = vsub.f32 %v111, %v113
    %v116 = vmul.f32 %v114, %v114
    %v117 = vmul.f32 %v115, %v115
    %v118 = vld [vmem:[%s100] sm:$0xff]
    %v119 = vld [vmem:[%s100 + $0x8] sm:$0xff]
    %v120 = vadd.f32 %v118, 0.01
    %v121 = vadd.f32 %v119, 0.01
    %v122 = vrcp.pop %v120
    %v123 = vmul.f32 %v120, %v122
    %v124 = vsub.f32 1.0, %v123
    %v125 = vmul.f32 %v122, %v124
    %v126 = vadd.f32 %v122, %v125
    %vm127 = vweird.f32 %v120
    %vm128 = vweird.f32 %v122
    %vm129 = vmor %vm127, %vm128
    %v130 = vsel %vm129, %v122, %v126
    %v131 = vand.u32 2147483647, %v120
    %vm132 = vcmp.eq.f32.partialorder %v131, 8.507059e+37
    %v133 = vand.u32 %v120, 2147483648
    %v134 = vor.u32 1.1754944e-38, %v133
    %v135 = vsel %vm132, %v134, %v130
    %v136 = vrcp.pop %v121
    %v137 = vmul.f32 %v121, %v136
    %v138 = vsub.f32 1.0, %v137
    %v139 = vmul.f32 %v136, %v138
    %v140 = vadd.f32 %v136, %v139
    %vm141 = vweird.f32 %v121
    %vm142 = vweird.f32 %v136
    %vm143 = vmor %vm141, %vm142
    %v144 = vsel %vm143, %v136, %v140
    %v145 = vand.u32 2147483647, %v121
    %vm146 = vcmp.eq.f32.partialorder %v145, 8.507059e+37
    %v147 = vand.u32 %v121, 2147483648
    %v148 = vor.u32 1.1754944e-38, %v147
    %v149 = vsel %vm146, %v148, %v144
    %v150 = vmul.f32 %v135, %v135
    %v151 = vmul.f32 %v149, %v149
    %s152 = sadd.s32 0, 0
    %s153 = smul.u32 %s152, 16
    %v154 = vlaneseq
    %v155 = vshrl.u32 %v154, 7
    %v156 = vadd.s32 %v155, 8
    %v157 = vstv %s153
    %v158 = vadd.s32 %v157, %v155
    %v159 = vadd.s32 %v157, %v156
    %vm160 = vcmp.lt.s32.totalorder %v158, 16
    %vm161 = vcmp.lt.s32.totalorder %v159, 16
    %163 = vset.pattern.permute.xlu0 0
    %164 = vperm.xlu0 %163, %v150
    %v165 = vpop.permute.xlu0 %164
    %168 = vset.pattern.permute.xlu0 0
    %169 = vperm.xlu0 %168, %v151
    %v170 = vpop.permute.xlu0 %169
    %v172 = vmul.f32 %v165, %v116
    %v173 = vmul.f32 %v170, %v117
    %v174 = vsel %vm160, 1, 0
    %v175 = vsel %vm161, 1, 0
    %vm176 = vcmp.eq.s32.totalorder %v174, 1
    %vm177 = vcmp.eq.s32.totalorder %v175, 1
    %v178 = vsel %vm176, %v172, 0.0
    %v179 = vsel %vm177, %v173, 0.0
    %v180 = vld [vmem:[#allocation2] sm:$0x1]
    %v181 = vadd.f32 %v178, %v179
    %v182 = vrot.slane %v181, 4
    %v183 = vadd.f32 %v181, %v182
    %v184 = vrot.slane %v183, 2
    %v185 = vadd.f32 %v183, %v184
    %v186 = vrot.slane %v185, 1
    %v187 = vadd.f32 %v185, %v186
    %v188 = vadd.f32 %v180, %v187
    %189 = vst [vmem:[#allocation2] sm:$0x1] %v188
    // Predicated region
    $region22: #{tpu_custom_call.1} parent=1 // pred_check
      %p190 = pneg %p105
    $region23: #{tpu_custom_call.1} parent=1 // pred_check_branch
      %192 = sbr.rel (%p190) target = $region25
    $region24: #{tpu_custom_call.1} parent=1 // pred_region
      %v193 = vld [vmem:[#allocation2] sm:$0x1]
      %vm194 = vcmask 1040384
      %v195 = vsel %vm194, %v193, 0.0
      %196 = vadd.xlane.f32.xlu0 %v195
      %v197 = vpop.xlane.xlu0 %196
      %v198 = vrot.slane %v197, 4
      %v199 = vadd.f32 %v197, %v198
      %v200 = vrot.slane %v199, 2
      %v201 = vadd.f32 %v199, %v200
      %v202 = vrot.slane %v201, 1
      %v203 = vadd.f32 %v201, %v202
      %s204 = vtos %v203
      %vm205 = vcmp.eq.s32.totalorder %v155, 0
      %v206 = vlaneseq
      %v207 = vand.u32 %v206, 127
      %vm208 = vcmp.eq.s32.totalorder %v207, 0
      %vm209 = vmand %vm205, %vm208
      %v210 = vstv %s204
      %v211 = vsel %vm209, %v210, 0.0
      %212 = vst [vmem:[#allocation6] sm:$0xff] %v211
    $region25: #{tpu_custom_call.1} parent=1 // pred_fallthru
      _
    // Predicated region
    $region26: #{tpu_custom_call.1} parent=1 // pred_check
      _
    $region27: #{tpu_custom_call.1} parent=1 // pred_check_branch
      %214 = sbr.rel (0) target = $region29
    $region28: #{tpu_custom_call.1} parent=1 // pred_region
      %216 = vsyncadd [#allocation5], 0
      %s218 = sshll.u32 [#allocation6], 4
      %s219 = int_to_ptr.vmem [resolvable:$true] %s218
      %s220 = sshll.u32 %s3, 4
      %s221 = int_to_ptr.hbm [resolvable:$true] %s220
      %223 = dma.vmem_to_hbm [thread:$0]  %s219, 128, %s221, [#allocation5]
    $region29: #{tpu_custom_call.1} parent=1 // pred_fallthru
      _
    // Predicated region
    $region30: #{tpu_custom_call.1} parent=1 // pred_check
      _
    $region31: #{tpu_custom_call.1} parent=1 // pred_check_branch
      %225 = sbr.rel (0) target = $region33
    $region32: #{tpu_custom_call.1} parent=1 // pred_region
      %227 = dma.done [#allocation5], 128
    $region33: #{tpu_custom_call.1} parent=1 // pred_fallthru
      _
    %228 = vsyncpa [#allocation4], 1
    %229 = vsyncpa [#allocation5], 1

</llo_original>
